<compile_context>
chip_gen: v5e
topology: v5e:2x2
jax: 0.10.0
libtpu: 0.0.40
codegen_flags: <defaults>
</compile_context>

<pallas_src>
import jax
import jax.numpy as jnp
from jax.experimental import pallas as pl
from jax.experimental.pallas import tpu as pltpu

IN_DIM = 40
H1, H2, H3 = 256, 128, 64
NUM_CLASSES = 8

MAX_BATCH_TILE = 1024    # large-batch tile (sweep 512/1024/2048)
SPLIT_THRESHOLD = 64     # above this, use >= 2 grid steps (v7x has 2 TensorCores)


def _round_up(n, m):
    return ((n + m - 1) // m) * m


def _mlp_kernel(x_ref,
                w1_ref, b1_ref,
                w2_ref, b2_ref,
                w3_ref, b3_ref,
                w4_ref, b4_ref,
                o_ref):
    # bf16 operands into the MXU, f32 accumulation, f32 bias add + relu on VPU.
    x = x_ref[...].astype(jnp.bfloat16)

    h = jnp.dot(x, w1_ref[...], preferred_element_type=jnp.float32) + b1_ref[...]
    h = jnp.maximum(h, 0.0)                       # relu(fc1); dropout -> identity (eval)

    h = jnp.dot(h.astype(jnp.bfloat16), w2_ref[...],
                preferred_element_type=jnp.float32) + b2_ref[...]
    h = jnp.maximum(h, 0.0)                       # relu(fc2)

    h = jnp.dot(h.astype(jnp.bfloat16), w3_ref[...],
                preferred_element_type=jnp.float32) + b3_ref[...]
    h = jnp.maximum(h, 0.0)                       # relu(fc3)

    out = jnp.dot(h.astype(jnp.bfloat16), w4_ref[...],
                  preferred_element_type=jnp.float32) + b4_ref[...]
    o_ref[...] = out.astype(o_ref.dtype)


@jax.jit
def emotion_model_forward(x, params):
    """x: (B, 40) float32.  params: bf16 (in,out) weights, f32 (1,out) biases."""
    B = x.shape[0]
    num_classes = params["w4"].shape[1]

    # ---- Batch tile selection (static under jit) ---------------------------
    if B <= SPLIT_THRESHOLD:
        tile = _round_up(max(B, 1), 8)           # one grid step, whole batch
    elif B <= 2 * MAX_BATCH_TILE:
        tile = _round_up(pl.cdiv(B, 2), 8)       # exactly 2 steps -> both TCs on v7x
    else:
        tile = MAX_BATCH_TILE                    # large batch: amortize step overhead
    grid = (pl.cdiv(B, tile),)                   # ragged last block handled by Pallas

    def resident(arr):
        # whole-array block, constant index map -> stays VMEM-resident across steps
        return pl.BlockSpec(arr.shape, lambda i: (0, 0))

    in_specs = [
        pl.BlockSpec((tile, IN_DIM), lambda i: (i, 0)),
        resident(params["w1"]), resident(params["b1"]),
        resident(params["w2"]), resident(params["b2"]),
        resident(params["w3"]), resident(params["b3"]),
        resident(params["w4"]), resident(params["b4"]),
    ]
    out_spec = pl.BlockSpec((tile, num_classes), lambda i: (i, 0))

    flops = 2 * B * (IN_DIM * H1 + H1 * H2 + H2 * H3 + H3 * num_classes)
    param_bytes = sum(int(v.size) * v.dtype.itemsize for v in params.values())
    bytes_accessed = B * (IN_DIM + num_classes) * 4 + param_bytes

    return pl.pallas_call(
        _mlp_kernel,
        out_shape=jax.ShapeDtypeStruct((B, num_classes), jnp.float32),
        grid_spec=pltpu.PrefetchScalarGridSpec(
            num_scalar_prefetch=0,
            grid=grid,
            in_specs=in_specs,
            out_specs=out_spec,
        ),
        compiler_params=pltpu.CompilerParams(
            dimension_semantics=("parallel",)),
        cost_estimate=pl.CostEstimate(
            flops=flops, transcendentals=0, bytes_accessed=bytes_accessed),
    )(x,
      params["w1"], params["b1"],
      params["w2"], params["b2"],
      params["w3"], params["b3"],
      params["w4"], params["b4"])


def init_params(key, num_classes=NUM_CLASSES):
    """nn.Linear-style init (U(-1/sqrt(fan_in), +)); weights stored bf16 once."""
    dims = [(IN_DIM, H1), (H1, H2), (H2, H3), (H3, num_classes)]
    params = {}
    for idx, (fan_in, fan_out) in enumerate(dims, start=1):
        key, kw, kb = jax.random.split(key, 3)
        bound = float(fan_in) ** -0.5
        params[f"w{idx}"] = jax.random.uniform(
            kw, (fan_in, fan_out), jnp.float32, -bound, bound).astype(jnp.bfloat16)
        params[f"b{idx}"] = jax.random.uniform(
            kb, (1, fan_out), jnp.float32, -bound, bound)
    return params


def reference_forward(x, params):
    """Same math/precision (bf16 MXU operands, f32 accumulation) with plain XLA."""
    h = x
    for i in (1, 2, 3):
        h = jnp.dot(h.astype(jnp.bfloat16), params[f"w{i}"],
                    preferred_element_type=jnp.float32) + params[f"b{i}"]
        h = jnp.maximum(h, 0.0)
    return jnp.dot(h.astype(jnp.bfloat16), params["w4"],
                   preferred_element_type=jnp.float32) + params["b4"]


if __name__ == "__main__":
    key = jax.random.PRNGKey(0)
    key, kx1, kx2, kx3 = jax.random.split(key, 4)
    params = init_params(key, NUM_CLASSES)

    # Small batch (single-tile path).
    x = jax.random.normal(kx1, (16, IN_DIM), dtype=jnp.float32)
    out = jax.block_until_ready(emotion_model_forward(x, params))
    ref = reference_forward(x, params)
    assert out.shape == (16, NUM_CLASSES)
    assert jnp.allclose(out, ref, atol=1e-2, rtol=1e-2), "mismatch vs reference (B=16)"

    # Non-multiple-of-8 batch exercises the ragged (partial-block) path.
    x2 = jax.random.normal(kx2, (37, IN_DIM), dtype=jnp.float32)
    out2 = jax.block_until_ready(emotion_model_forward(x2, params))
    ref2 = reference_forward(x2, params)
    assert out2.shape == (37, NUM_CLASSES)
    assert jnp.allclose(out2, ref2, atol=1e-2, rtol=1e-2), "mismatch vs reference (B=37)"

    # Medium batch exercises the 2-tile (dual-TensorCore) path.
    x3 = jax.random.normal(kx3, (96, IN_DIM), dtype=jnp.float32)
    out3 = jax.block_until_ready(emotion_model_forward(x3, params))
    ref3 = reference_forward(x3, params)
    assert out3.shape == (96, NUM_CLASSES)
    assert jnp.allclose(out3, ref3, atol=1e-2, rtol=1e-2), "mismatch vs reference (B=96)"

    print("KERNEL_OK")
</pallas_src>

<mosaic_0001>
module attributes {stable_mosaic.version = 11 : i64} {
  func.func @_mlp_kernel(%arg0: i32, %arg1: memref<16x40xf32, #tpu.memory_space<vmem>>, %arg2: memref<40x256xbf16, #tpu.memory_space<vmem>>, %arg3: memref<1x256xf32, #tpu.memory_space<vmem>>, %arg4: memref<256x128xbf16, #tpu.memory_space<vmem>>, %arg5: memref<1x128xf32, #tpu.memory_space<vmem>>, %arg6: memref<128x64xbf16, #tpu.memory_space<vmem>>, %arg7: memref<1x64xf32, #tpu.memory_space<vmem>>, %arg8: memref<64x8xbf16, #tpu.memory_space<vmem>>, %arg9: memref<1x8xf32, #tpu.memory_space<vmem>>, %arg10: memref<16x8xf32, #tpu.memory_space<vmem>>) attributes {dimension_semantics = [#tpu.dimension_semantics<parallel>], iteration_bounds = array<i64: 1>, scalar_prefetch = 0 : i64, scratch_operands = 0 : i64, tpu.core_type = #tpu.core_type<tc>, window_params = [{transform_indices = @transform_0, window_bounds = array<i64: 16, 40>}, {pipeline_mode = #tpu.pipeline_mode<synchronous>, transform_indices = @transform_1, window_bounds = array<i64: 40, 256>}, {pipeline_mode = #tpu.pipeline_mode<synchronous>, transform_indices = @transform_2, window_bounds = array<i64: 1, 256>}, {pipeline_mode = #tpu.pipeline_mode<synchronous>, transform_indices = @transform_3, window_bounds = array<i64: 256, 128>}, {pipeline_mode = #tpu.pipeline_mode<synchronous>, transform_indices = @transform_4, window_bounds = array<i64: 1, 128>}, {pipeline_mode = #tpu.pipeline_mode<synchronous>, transform_indices = @transform_5, window_bounds = array<i64: 128, 64>}, {pipeline_mode = #tpu.pipeline_mode<synchronous>, transform_indices = @transform_6, window_bounds = array<i64: 1, 64>}, {pipeline_mode = #tpu.pipeline_mode<synchronous>, transform_indices = @transform_7, window_bounds = array<i64: 64, 8>}, {pipeline_mode = #tpu.pipeline_mode<synchronous>, transform_indices = @transform_8, window_bounds = array<i64: 1, 8>}, {transform_indices = @transform_9, window_bounds = array<i64: 16, 8>}]} {
    %c0 = arith.constant 0 : index
    %c0_0 = arith.constant 0 : index
    %0 = vector.load %arg1[%c0, %c0_0] : memref<16x40xf32, #tpu.memory_space<vmem>>, vector<16x40xf32>
    %1 = arith.truncf %0 : vector<16x40xf32> to vector<16x40xbf16>
    %c0_1 = arith.constant 0 : index
    %c0_2 = arith.constant 0 : index
    %2 = vector.load %arg2[%c0_1, %c0_2] : memref<40x256xbf16, #tpu.memory_space<vmem>>, vector<40x256xbf16>
    %cst = arith.constant dense<0.000000e+00> : vector<16x256xf32>
    %3 = tpu.matmul %1, %2, %cst {dimension_numbers = #tpu.dot_dimension_numbers<[1], [0], [0], [1], [0, 0, 1, 1], [], []>} : vector<16x40xbf16>, vector<40x256xbf16>, vector<16x256xf32> -> vector<16x256xf32>
    %c0_3 = arith.constant 0 : index
    %c0_4 = arith.constant 0 : index
    %4 = vector.load %arg3[%c0_3, %c0_4] : memref<1x256xf32, #tpu.memory_space<vmem>>, vector<1x256xf32>
    %5 = vector.broadcast %4 : vector<1x256xf32> to vector<16x256xf32>
    %6 = arith.addf %3, %5 : vector<16x256xf32>
    %cst_5 = arith.constant 0.000000e+00 : f32
    %7 = vector.broadcast %cst_5 : f32 to vector<16x256xf32>
    %8 = arith.maximumf %6, %7 : vector<16x256xf32>
    %9 = arith.truncf %8 : vector<16x256xf32> to vector<16x256xbf16>
    %c0_6 = arith.constant 0 : index
    %c0_7 = arith.constant 0 : index
    %10 = vector.load %arg4[%c0_6, %c0_7] : memref<256x128xbf16, #tpu.memory_space<vmem>>, vector<256x128xbf16>
    %cst_8 = arith.constant dense<0.000000e+00> : vector<16x128xf32>
    %11 = tpu.matmul %9, %10, %cst_8 {dimension_numbers = #tpu.dot_dimension_numbers<[1], [0], [0], [1], [0, 0, 1, 1], [], []>} : vector<16x256xbf16>, vector<256x128xbf16>, vector<16x128xf32> -> vector<16x128xf32>
    %c0_9 = arith.constant 0 : index
    %c0_10 = arith.constant 0 : index
    %12 = vector.load %arg5[%c0_9, %c0_10] : memref<1x128xf32, #tpu.memory_space<vmem>>, vector<1x128xf32>
    %13 = vector.broadcast %12 : vector<1x128xf32> to vector<16x128xf32>
    %14 = arith.addf %11, %13 : vector<16x128xf32>
    %cst_11 = arith.constant 0.000000e+00 : f32
    %15 = vector.broadcast %cst_11 : f32 to vector<16x128xf32>
    %16 = arith.maximumf %14, %15 : vector<16x128xf32>
    %17 = arith.truncf %16 : vector<16x128xf32> to vector<16x128xbf16>
    %c0_12 = arith.constant 0 : index
    %c0_13 = arith.constant 0 : index
    %18 = vector.load %arg6[%c0_12, %c0_13] : memref<128x64xbf16, #tpu.memory_space<vmem>>, vector<128x64xbf16>
    %cst_14 = arith.constant dense<0.000000e+00> : vector<16x64xf32>
    %19 = tpu.matmul %17, %18, %cst_14 {dimension_numbers = #tpu.dot_dimension_numbers<[1], [0], [0], [1], [0, 0, 1, 1], [], []>} : vector<16x128xbf16>, vector<128x64xbf16>, vector<16x64xf32> -> vector<16x64xf32>
    %c0_15 = arith.constant 0 : index
    %c0_16 = arith.constant 0 : index
    %20 = vector.load %arg7[%c0_15, %c0_16] : memref<1x64xf32, #tpu.memory_space<vmem>>, vector<1x64xf32>
    %21 = vector.broadcast %20 : vector<1x64xf32> to vector<16x64xf32>
    %22 = arith.addf %19, %21 : vector<16x64xf32>
    %cst_17 = arith.constant 0.000000e+00 : f32
    %23 = vector.broadcast %cst_17 : f32 to vector<16x64xf32>
    %24 = arith.maximumf %22, %23 : vector<16x64xf32>
    %25 = arith.truncf %24 : vector<16x64xf32> to vector<16x64xbf16>
    %c0_18 = arith.constant 0 : index
    %c0_19 = arith.constant 0 : index
    %26 = vector.load %arg8[%c0_18, %c0_19] : memref<64x8xbf16, #tpu.memory_space<vmem>>, vector<64x8xbf16>
    %cst_20 = arith.constant dense<0.000000e+00> : vector<16x8xf32>
    %27 = tpu.matmul %25, %26, %cst_20 {dimension_numbers = #tpu.dot_dimension_numbers<[1], [0], [0], [1], [0, 0, 1, 1], [], []>} : vector<16x64xbf16>, vector<64x8xbf16>, vector<16x8xf32> -> vector<16x8xf32>
    %c0_21 = arith.constant 0 : index
    %c0_22 = arith.constant 0 : index
    %28 = vector.load %arg9[%c0_21, %c0_22] : memref<1x8xf32, #tpu.memory_space<vmem>>, vector<1x8xf32>
    %29 = vector.broadcast %28 : vector<1x8xf32> to vector<16x8xf32>
    %30 = arith.addf %27, %29 : vector<16x8xf32>
    %c0_23 = arith.constant 0 : index
    %c0_24 = arith.constant 0 : index
    %31 = vector.load %arg10[%c0_23, %c0_24] : memref<16x8xf32, #tpu.memory_space<vmem>>, vector<16x8xf32>
    tpu.vector_store %arg10[%c0_23, %c0_24], %30 {strides = array<i32>} : memref<16x8xf32, #tpu.memory_space<vmem>>, vector<16x8xf32>,
    return
  }
  func.func @transform_0(%arg0: i32) -> (i32, i32) {
    %c0_i32 = arith.constant 0 : i32
    %c0_i32_0 = arith.constant 0 : i32
    return %arg0, %c0_i32 : i32, i32
  }
  func.func @transform_1(%arg0: i32) -> (i32, i32) {
    %c0_i32 = arith.constant 0 : i32
    %c0_i32_0 = arith.constant 0 : i32
    %c0_i32_1 = arith.constant 0 : i32
    return %c0_i32, %c0_i32_0 : i32, i32
  }
  func.func @transform_2(%arg0: i32) -> (i32, i32) {
    %c0_i32 = arith.constant 0 : i32
    %c0_i32_0 = arith.constant 0 : i32
    %c0_i32_1 = arith.constant 0 : i32
    return %c0_i32, %c0_i32_0 : i32, i32
  }
  func.func @transform_3(%arg0: i32) -> (i32, i32) {
    %c0_i32 = arith.constant 0 : i32
    %c0_i32_0 = arith.constant 0 : i32
    %c0_i32_1 = arith.constant 0 : i32
    return %c0_i32, %c0_i32_0 : i32, i32
  }
  func.func @transform_4(%arg0: i32) -> (i32, i32) {
    %c0_i32 = arith.constant 0 : i32
    %c0_i32_0 = arith.constant 0 : i32
    %c0_i32_1 = arith.constant 0 : i32
    return %c0_i32, %c0_i32_0 : i32, i32
  }
  func.func @transform_5(%arg0: i32) -> (i32, i32) {
    %c0_i32 = arith.constant 0 : i32
    %c0_i32_0 = arith.constant 0 : i32
    %c0_i32_1 = arith.constant 0 : i32
    return %c0_i32, %c0_i32_0 : i32, i32
  }
  func.func @transform_6(%arg0: i32) -> (i32, i32) {
    %c0_i32 = arith.constant 0 : i32
    %c0_i32_0 = arith.constant 0 : i32
    %c0_i32_1 = arith.constant 0 : i32
    return %c0_i32, %c0_i32_0 : i32, i32
  }
  func.func @transform_7(%arg0: i32) -> (i32, i32) {
    %c0_i32 = arith.constant 0 : i32
    %c0_i32_0 = arith.constant 0 : i32
    %c0_i32_1 = arith.constant 0 : i32
    return %c0_i32, %c0_i32_0 : i32, i32
  }
  func.func @transform_8(%arg0: i32) -> (i32, i32) {
    %c0_i32 = arith.constant 0 : i32
    %c0_i32_0 = arith.constant 0 : i32
    %c0_i32_1 = arith.constant 0 : i32
    return %c0_i32, %c0_i32_0 : i32, i32
  }
  func.func @transform_9(%arg0: i32) -> (i32, i32) {
    %c0_i32 = arith.constant 0 : i32
    %c0_i32_0 = arith.constant 0 : i32
    return %arg0, %c0_i32 : i32, i32
  }
}

</mosaic_0001>

<llo_original>
// kernel: emotion_model_forward.1
$region0: #{emotion_model_forward.1}
  #allocation0 [shape = 'u32[]', space=smem, size = 0x4, offset = 0x4, fixed_abs, tag = 'smem constant byte address 0x4 - core index']
  #allocation1 [shape = 'u32[72,128]{1,0:T(1,128)}', space=vmem, size = 0x9000, scoped, tag = 'internal scratch']
  %s0 = inlined_call_operand.hbm [shape: f32[16,40], index: 0, kind: input, shape index: {}]
  %s1 = inlined_call_operand.hbm [shape: bf16[40,256], index: 1, kind: input, shape index: {}]
  %s2 = inlined_call_operand.vmem [shape: f32[1,256], index: 2, kind: input, shape index: {}]
  %s3 = inlined_call_operand.vmem [shape: bf16[256,128], index: 3, kind: input, shape index: {}]
  %s4 = inlined_call_operand.vmem [shape: f32[1,128], index: 4, kind: input, shape index: {}]
  %s5 = inlined_call_operand.vmem [shape: bf16[128,64], index: 5, kind: input, shape index: {}]
  %s6 = inlined_call_operand.vmem [shape: f32[1,64], index: 6, kind: input, shape index: {}]
  %s7 = inlined_call_operand.vmem [shape: bf16[64,8], index: 7, kind: input, shape index: {}]
  %s8 = inlined_call_operand.vmem [shape: f32[1,8], index: 8, kind: input, shape index: {}]
  %s9 = inlined_call_operand.vmem [shape: f32[16,8], index: 9, kind: output, shape index: {}]
  %s10 = sld [smem:[#allocation0]]
  $region54: #{emotion_model_forward.1} parent=0
    _
  %s12 = ssub.s32 1, %s10
  %s13 = scalar_select 0, %s12, %s10
  $region1: #{emotion_model_forward.1} parent=0
    #allocation2 [shape = 'u8[8192]{0}', space=vmem, size = 0x2000, scoped, tag = 'input window, operand 0, single buffered']
    #allocation3 [shape = 's32[1]{0}', space=sflag, size = 0x4, scoped, tag = 'scoped memory for emotion_model_forward.1']
    #allocation4 [shape = 'u8[20480]{0}', space=vmem, size = 0x5000, scoped, tag = 'input window, operand 1, single buffered']
    #allocation5 [shape = 's32[1]{0}', space=sflag, size = 0x4, scoped, tag = 'scoped memory for emotion_model_forward.1']
    %14 = vsyncpa [#allocation3], 0
    %15 = vsyncpa [#allocation5], 0
    // Predicated region
    $region2: #{emotion_model_forward.1} parent=1 // pred_check
      _
    $region3: #{emotion_model_forward.1} parent=1 // pred_check_branch
      %17 = sbr.rel (0) target = $region5
    $region4: #{emotion_model_forward.1} parent=1 // pred_region
      %19 = vsyncadd [#allocation3], 0
      %s20 = sshll.u32 %s0, 4
      %s21 = int_to_ptr.hbm [resolvable:$true] %s20
      %s22 = sshll.u32 [#allocation2], 4
      %s23 = int_to_ptr.vmem [resolvable:$true] %s22
      %28 = dma.hbm_to_vmem [thread:$0]  %s21, 256, %s23, [#allocation3], 128, 128, 8
    $region5: #{emotion_model_forward.1} parent=1 // pred_fallthru
      _
    // Predicated region
    $region6: #{emotion_model_forward.1} parent=1 // pred_check
      _
    $region7: #{emotion_model_forward.1} parent=1 // pred_check_branch
      %30 = sbr.rel (0) target = $region9
    $region8: #{emotion_model_forward.1} parent=1 // pred_region
      %32 = vsyncadd [#allocation5], 0
      %s33 = sshll.u32 %s1, 4
      %s34 = int_to_ptr.hbm [resolvable:$true] %s33
      %s35 = sshll.u32 [#allocation4], 4
      %s36 = int_to_ptr.vmem [resolvable:$true] %s35
      %41 = dma.hbm_to_vmem [thread:$0]  %s34, 640, %s36, [#allocation5], 128, 128, 8
    $region9: #{emotion_model_forward.1} parent=1 // pred_fallthru
      _
    // Predicated region
    $region10: #{emotion_model_forward.1} parent=1 // pred_check
      _
    $region11: #{emotion_model_forward.1} parent=1 // pred_check_branch
      %43 = sbr.rel (0) target = $region13
    $region12: #{emotion_model_forward.1} parent=1 // pred_region
      _
    $region13: #{emotion_model_forward.1} parent=1 // pred_fallthru
      _
    // Predicated region
    $region14: #{emotion_model_forward.1} parent=1 // pred_check
      _
    $region15: #{emotion_model_forward.1} parent=1 // pred_check_branch
      %45 = sbr.rel (0) target = $region17
    $region16: #{emotion_model_forward.1} parent=1 // pred_region
      _
    $region17: #{emotion_model_forward.1} parent=1 // pred_fallthru
      _
    // Predicated region
    $region18: #{emotion_model_forward.1} parent=1 // pred_check
      _
    $region19: #{emotion_model_forward.1} parent=1 // pred_check_branch
      %47 = sbr.rel (0) target = $region21
    $region20: #{emotion_model_forward.1} parent=1 // pred_region
      _
    $region21: #{emotion_model_forward.1} parent=1 // pred_fallthru
      _
    // Predicated region
    $region22: #{emotion_model_forward.1} parent=1 // pred_check
      _
    $region23: #{emotion_model_forward.1} parent=1 // pred_check_branch
      %49 = sbr.rel (0) target = $region25
    $region24: #{emotion_model_forward.1} parent=1 // pred_region
      _
    $region25: #{emotion_model_forward.1} parent=1 // pred_fallthru
      _
    // Predicated region
    $region26: #{emotion_model_forward.1} parent=1 // pred_check
      _
    $region27: #{emotion_model_forward.1} parent=1 // pred_check_branch
      %51 = sbr.rel (0) target = $region29
    $region28: #{emotion_model_forward.1} parent=1 // pred_region
      _
    $region29: #{emotion_model_forward.1} parent=1 // pred_fallthru
      _
    // Predicated region
    $region30: #{emotion_model_forward.1} parent=1 // pred_check
      _
    $region31: #{emotion_model_forward.1} parent=1 // pred_check_branch
      %53 = sbr.rel (0) target = $region33
    $region32: #{emotion_model_forward.1} parent=1 // pred_region
      _
    $region33: #{emotion_model_forward.1} parent=1 // pred_fallthru
      _
    // Predicated region
    $region34: #{emotion_model_forward.1} parent=1 // pred_check
      _
    $region35: #{emotion_model_forward.1} parent=1 // pred_check_branch
      %55 = sbr.rel (0) target = $region37
    $region36: #{emotion_model_forward.1} parent=1 // pred_region
      _
    $region37: #{emotion_model_forward.1} parent=1 // pred_fallthru
      _
    // Predicated region
    $region38: #{emotion_model_forward.1} parent=1 // pred_check
      _
    $region39: #{emotion_model_forward.1} parent=1 // pred_check_branch
      %57 = sbr.rel (0) target = $region41
    $region40: #{emotion_model_forward.1} parent=1 // pred_region
      %59 = dma.done [#allocation3], 256
    $region41: #{emotion_model_forward.1} parent=1 // pred_fallthru
      _
    // Predicated region
    $region42: #{emotion_model_forward.1} parent=1 // pred_check
      _
    $region43: #{emotion_model_forward.1} parent=1 // pred_check_branch
      %61 = sbr.rel (0) target = $region45
    $region44: #{emotion_model_forward.1} parent=1 // pred_region
      %63 = dma.done [#allocation5], 640
    $region45: #{emotion_model_forward.1} parent=1 // pred_fallthru
      _
    %v65 = vld [vmem:[#allocation2] sm:$0xff]
    %v66 = vld [vmem:[#allocation2 + $0x8] sm:$0xff]
    %v67 = vpack.c.bf16 %v66, %v65
    %v68 = vld [vmem:[#allocation4] sm:$0xff]
    %v69 = vld [vmem:[#allocation4 + $0x8] sm:$0xff]
    %v70 = vld [vmem:[#allocation4 + $0x10] sm:$0xff]
    %v71 = vld [vmem:[#allocation4 + $0x18] sm:$0xff]
    %v72 = vld [vmem:[#allocation4 + $0x20] sm:$0xff]
    %v73 = vld [vmem:[%s2] sm:$0x3]
    %v75 = vperm.slane %v73, 0
    %v76 = vperm.slane %v73, 1
    %v84 = vunpack.c.l.b16 %v68
    %v85 = vunpack.c.h.b16 %v68
    %v86 = vunpack.c.l.b16 %v69
    %v87 = vunpack.c.h.b16 %v69
    %v88 = vunpack.c.l.b16 %v70
    %v89 = vunpack.c.h.b16 %v70
    %v90 = vunpack.c.l.b16 %v71
    %v91 = vunpack.c.h.b16 %v71
    %v92 = vunpack.c.l.b16 %v72
    %v93 = vunpack.c.h.b16 %v72
    %v94 = vpack.c.b16 %v86, %v84
    %v95 = vpack.c.b16 %v87, %v85
    %v96 = vpack.c.b16 %v90, %v88
    %v97 = vpack.c.b16 %v91, %v89
    %v98 = vpack.c.b16 %v92, %v92
    %v99 = vpack.c.b16 %v93, %v93
    %vm104 = vcmask 326656
    %v106 = vsel %vm104, %v67, 0
    %vm108 = vcmask 1043456
    %v110 = vsel %vm108, %v98, 0
    %v113 = vsel %vm108, %v99, 0
    %115 = vmatpush.bf16.msra.mxu0 0
    %116 = vmatpush.bf16.msra.mxu0 0
    %117 = vmatpush.bf16.msra.mxu0 0
    %118 = vmatpush.bf16.msra.mxu0 0
    %119 = vmatpush.bf16.msra.mxu0 0
    %120 = vmatpush.bf16.msra.mxu0 %v110
    %121 = vmatpush.bf16.msra.mxu0 %v96
    %122 = vmatpush.bf16.msra.mxu0 %v94
    %123 = vmatmul.bf16.gmra.mxu0 %v106
    %v124 = vpop.f32.mrf.mxu0
    %v125 = vadd.f32 %v75, %v124
    %v126 = vpop.f32.mrf.mxu0
    %v127 = vadd.f32 %v75, %v126
    %128 = vdwg.mxu0
    %129 = vmatpush.bf16.msra.mxu0 0
    %130 = vmatpush.bf16.msra.mxu0 0
    %131 = vmatpush.bf16.msra.mxu0 0
    %132 = vmatpush.bf16.msra.mxu0 0
    %133 = vmatpush.bf16.msra.mxu0 0
    %134 = vmatpush.bf16.msra.mxu0 %v113
    %135 = vmatpush.bf16.msra.mxu0 %v97
    %136 = vmatpush.bf16.msra.mxu0 %v95
    %137 = vmatmul.bf16.gmra.mxu0 %v106
    %v138 = vpop.f32.mrf.mxu0
    %v139 = vadd.f32 %v76, %v138
    %v140 = vpop.f32.mrf.mxu0
    %v141 = vadd.f32 %v76, %v140
    %142 = vdwg.mxu0
    %v143 = vmax.f32 %v125, 0.0
    %v144 = vmax.f32 %v139, 0.0
    %v145 = vmax.f32 %v127, 0.0
    %v146 = vmax.f32 %v141, 0.0
    %v147 = vpack.c.bf16 %v145, %v143
    %v148 = vpack.c.bf16 %v146, %v144
    %v149 = vld [vmem:[%s3] sm:$0xf]
    %v150 = vld [vmem:[%s3 + $0x4] sm:$0xf]
    %v151 = vld [vmem:[%s3 + $0x8] sm:$0xf]
    %v152 = vld [vmem:[%s3 + $0xc] sm:$0xf]
    %v153 = vld [vmem:[%s3 + $0x10] sm:$0xf]
    %v154 = vld [vmem:[%s3 + $0x14] sm:$0xf]
    %v155 = vld [vmem:[%s3 + $0x18] sm:$0xf]
    %v156 = vld [vmem:[%s3 + $0x1c] sm:$0xf]
    %v157 = vld [vmem:[%s3 + $0x20] sm:$0xf]
    %v158 = vld [vmem:[%s3 + $0x24] sm:$0xf]
    %v159 = vld [vmem:[%s3 + $0x28] sm:$0xf]
    %v160 = vld [vmem:[%s3 + $0x2c] sm:$0xf]
    %v161 = vld [vmem:[%s3 + $0x30] sm:$0xf]
    %v162 = vld [vmem:[%s3 + $0x34] sm:$0xf]
    %v163 = vld [vmem:[%s3 + $0x38] sm:$0xf]
    %v164 = vld [vmem:[%s3 + $0x3c] sm:$0xf]
    %v165 = vld [vmem:[%s3 + $0x40] sm:$0xf]
    %v166 = vld [vmem:[%s3 + $0x44] sm:$0xf]
    %v167 = vld [vmem:[%s3 + $0x48] sm:$0xf]
    %v168 = vld [vmem:[%s3 + $0x4c] sm:$0xf]
    %v169 = vld [vmem:[%s3 + $0x50] sm:$0xf]
    %v170 = vld [vmem:[%s3 + $0x54] sm:$0xf]
    %v171 = vld [vmem:[%s3 + $0x58] sm:$0xf]
    %v172 = vld [vmem:[%s3 + $0x5c] sm:$0xf]
    %v173 = vld [vmem:[%s3 + $0x60] sm:$0xf]
    %v174 = vld [vmem:[%s3 + $0x64] sm:$0xf]
    %v175 = vld [vmem:[%s3 + $0x68] sm:$0xf]
    %v176 = vld [vmem:[%s3 + $0x6c] sm:$0xf]
    %v177 = vld [vmem:[%s3 + $0x70] sm:$0xf]
    %v178 = vld [vmem:[%s3 + $0x74] sm:$0xf]
    %v179 = vld [vmem:[%s3 + $0x78] sm:$0xf]
    %v180 = vld [vmem:[%s3 + $0x7c] sm:$0xf]
    %v181 = vld [vmem:[%s4] sm:$0x1]
    %v183 = vperm.slane %v181, 0
    %v217 = vunpack.c.l.b16 %v149
    %v218 = vunpack.c.l.b16 %v150
    %v219 = vunpack.c.l.b16 %v151
    %v220 = vunpack.c.l.b16 %v152
    %v221 = vunpack.c.l.b16 %v153
    %v222 = vunpack.c.l.b16 %v154
    %v223 = vunpack.c.l.b16 %v155
    %v224 = vunpack.c.l.b16 %v156
    %v225 = vunpack.c.l.b16 %v157
    %v226 = vunpack.c.l.b16 %v158
    %v227 = vunpack.c.l.b16 %v159
    %v228 = vunpack.c.l.b16 %v160
    %v229 = vunpack.c.l.b16 %v161
    %v230 = vunpack.c.l.b16 %v162
    %v231 = vunpack.c.l.b16 %v163
    %v232 = vunpack.c.l.b16 %v164
    %v233 = vunpack.c.l.b16 %v165
    %v234 = vunpack.c.l.b16 %v166
    %v235 = vunpack.c.l.b16 %v167
    %v236 = vunpack.c.l.b16 %v168
    %v237 = vunpack.c.l.b16 %v169
    %v238 = vunpack.c.l.b16 %v170
    %v239 = vunpack.c.l.b16 %v171
    %v240 = vunpack.c.l.b16 %v172
    %v241 = vunpack.c.l.b16 %v173
    %v242 = vunpack.c.l.b16 %v174
    %v243 = vunpack.c.l.b16 %v175
    %v244 = vunpack.c.l.b16 %v176
    %v245 = vunpack.c.l.b16 %v177
    %v246 = vunpack.c.l.b16 %v178
    %v247 = vunpack.c.l.b16 %v179
    %v248 = vunpack.c.l.b16 %v180
    %v249 = vpack.c.b16 %v218, %v217
    %v250 = vpack.c.b16 %v220, %v219
    %v251 = vpack.c.b16 %v222, %v221
    %v252 = vpack.c.b16 %v224, %v223
    %v253 = vpack.c.b16 %v226, %v225
    %v254 = vpack.c.b16 %v228, %v227
    %v255 = vpack.c.b16 %v230, %v229
    %v256 = vpack.c.b16 %v232, %v231
    %v257 = vpack.c.b16 %v234, %v233
    %v258 = vpack.c.b16 %v236, %v235
    %v259 = vpack.c.b16 %v238, %v237
    %v260 = vpack.c.b16 %v240, %v239
    %v261 = vpack.c.b16 %v242, %v241
    %v262 = vpack.c.b16 %v244, %v243
    %v263 = vpack.c.b16 %v246, %v245
    %v264 = vpack.c.b16 %v248, %v247
    %281 = vmatpush.bf16.msra.mxu0 %v256
    %282 = vmatpush.bf16.msra.mxu0 %v255
    %283 = vmatpush.bf16.msra.mxu0 %v254
    %284 = vmatpush.bf16.msra.mxu0 %v253
    %285 = vmatpush.bf16.msra.mxu0 %v252
    %286 = vmatpush.bf16.msra.mxu0 %v251
    %287 = vmatpush.bf16.msra.mxu0 %v250
    %288 = vmatpush.bf16.msra.mxu0 %v249
    %289 = vmatmul.bf16.gmra.mxu0 %v147
    %v290 = vpop.f32.mrf.mxu0
    %v291 = vadd.f32 %v183, %v290
    %v292 = vpop.f32.mrf.mxu0
    %v293 = vadd.f32 %v183, %v292
    %294 = vdwg.mxu0
    %295 = vmatpush.bf16.msra.mxu0 %v264
    %296 = vmatpush.bf16.msra.mxu0 %v263
    %297 = vmatpush.bf16.msra.mxu0 %v262
    %298 = vmatpush.bf16.msra.mxu0 %v261
    %299 = vmatpush.bf16.msra.mxu0 %v260
    %300 = vmatpush.bf16.msra.mxu0 %v259
    %301 = vmatpush.bf16.msra.mxu0 %v258
    %302 = vmatpush.bf16.msra.mxu0 %v257
    %303 = vmatmul.bf16.gmra.mxu0 %v148
    %v304 = vpop.f32.mrf.mxu0
    %v305 = vadd.f32 %v291, %v304
    %v306 = vpop.f32.mrf.mxu0
    %v307 = vadd.f32 %v293, %v306
    %308 = vdwg.mxu0
    %v309 = vmax.f32 %v305, 0.0
    %v310 = vmax.f32 %v307, 0.0
    %v311 = vpack.c.bf16 %v310, %v309
    %v312 = vld [vmem:[%s5] sm:$0xf]
    %v313 = vld [vmem:[%s5 + $0x4] sm:$0xf]
    %v314 = vld [vmem:[%s5 + $0x8] sm:$0xf]
    %v315 = vld [vmem:[%s5 + $0xc] sm:$0xf]
    %v316 = vld [vmem:[%s5 + $0x10] sm:$0xf]
    %v317 = vld [vmem:[%s5 + $0x14] sm:$0xf]
    %v318 = vld [vmem:[%s5 + $0x18] sm:$0xf]
    %v319 = vld [vmem:[%s5 + $0x1c] sm:$0xf]
    %v320 = vld [vmem:[%s5 + $0x20] sm:$0xf]
    %v321 = vld [vmem:[%s5 + $0x24] sm:$0xf]
    %v322 = vld [vmem:[%s5 + $0x28] sm:$0xf]
    %v323 = vld [vmem:[%s5 + $0x2c] sm:$0xf]
    %v324 = vld [vmem:[%s5 + $0x30] sm:$0xf]
    %v325 = vld [vmem:[%s5 + $0x34] sm:$0xf]
    %v326 = vld [vmem:[%s5 + $0x38] sm:$0xf]
    %v327 = vld [vmem:[%s5 + $0x3c] sm:$0xf]
    %v328 = vld [vmem:[%s6] sm:$0x1]
    %v330 = vperm.slane %v328, 0
    %v348 = vunpack.c.l.b16 %v312
    %v349 = vunpack.c.l.b16 %v313
    %v350 = vunpack.c.l.b16 %v314
    %v351 = vunpack.c.l.b16 %v315
    %v352 = vunpack.c.l.b16 %v316
    %v353 = vunpack.c.l.b16 %v317
    %v354 = vunpack.c.l.b16 %v318
    %v355 = vunpack.c.l.b16 %v319
    %v356 = vunpack.c.l.b16 %v320
    %v357 = vunpack.c.l.b16 %v321
    %v358 = vunpack.c.l.b16 %v322
    %v359 = vunpack.c.l.b16 %v323
    %v360 = vunpack.c.l.b16 %v324
    %v361 = vunpack.c.l.b16 %v325
    %v362 = vunpack.c.l.b16 %v326
    %v363 = vunpack.c.l.b16 %v327
    %v364 = vpack.c.b16 %v349, %v348
    %v365 = vpack.c.b16 %v351, %v350
    %v366 = vpack.c.b16 %v353, %v352
    %v367 = vpack.c.b16 %v355, %v354
    %v368 = vpack.c.b16 %v357, %v356
    %v369 = vpack.c.b16 %v359, %v358
    %v370 = vpack.c.b16 %v361, %v360
    %v371 = vpack.c.b16 %v363, %v362
    %380 = vmatpush.bf16.msra.mxu0 %v371
    %381 = vmatpush.bf16.msra.mxu0 %v370
    %382 = vmatpush.bf16.msra.mxu0 %v369
    %383 = vmatpush.bf16.msra.mxu0 %v368
    %384 = vmatpush.bf16.msra.mxu0 %v367
    %385 = vmatpush.bf16.msra.mxu0 %v366
    %386 = vmatpush.bf16.msra.mxu0 %v365
    %387 = vmatpush.bf16.msra.mxu0 %v364
    %388 = vmatmul.bf16.gmra.mxu0 %v311
    %v389 = vpop.f32.mrf.mxu0
    %v390 = vadd.f32 %v330, %v389
    %v391 = vpop.f32.mrf.mxu0
    %v392 = vadd.f32 %v330, %v391
    %393 = vdwg.mxu0
    %v394 = vmax.f32 %v390, 0.0
    %v395 = vmax.f32 %v392, 0.0
    %v396 = vpack.c.bf16 %v395, %v394
    %v397 = vld [vmem:[%s7] sm:$0xf]
    %v398 = vld [vmem:[%s7 + $0x4] sm:$0xf]
    %v399 = vld [vmem:[%s7 + $0x8] sm:$0xf]
    %v400 = vld [vmem:[%s7 + $0xc] sm:$0xf]
    %v401 = vld [vmem:[%s7 + $0x10] sm:$0xf]
    %v402 = vld [vmem:[%s7 + $0x14] sm:$0xf]
    %v403 = vld [vmem:[%s7 + $0x18] sm:$0xf]
    %v404 = vld [vmem:[%s7 + $0x1c] sm:$0xf]
    %v405 = vld [vmem:[%s8] sm:$0x1]
    %v407 = vperm.slane %v405, 0
    %v417 = vunpack.c.l.b16 %v397
    %v418 = vunpack.c.l.b16 %v398
    %v419 = vunpack.c.l.b16 %v399
    %v420 = vunpack.c.l.b16 %v400
    %v421 = vunpack.c.l.b16 %v401
    %v422 = vunpack.c.l.b16 %v402
    %v423 = vunpack.c.l.b16 %v403
    %v424 = vunpack.c.l.b16 %v404
    %v425 = vpack.c.b16 %v418, %v417
    %v426 = vpack.c.b16 %v420, %v419
    %v427 = vpack.c.b16 %v422, %v421
    %v428 = vpack.c.b16 %v424, %v423
    %vm433 = vcmask 523264
    %v435 = vsel %vm433, %v396, 0
    %437 = vmatpush.bf16.msra.mxu0 0
    %438 = vmatpush.bf16.msra.mxu0 0
    %439 = vmatpush.bf16.msra.mxu0 0
    %440 = vmatpush.bf16.msra.mxu0 0
    %441 = vmatpush.bf16.msra.mxu0 %v428
    %442 = vmatpush.bf16.msra.mxu0 %v427
    %443 = vmatpush.bf16.msra.mxu0 %v426
    %444 = vmatpush.bf16.msra.mxu0 %v425
    %445 = vmatmul.bf16.gmra.mxu0 %v435
    %v446 = vpop.f32.mrf.mxu0
    %v447 = vadd.f32 %v407, %v446
    %v448 = vpop.f32.mrf.mxu0
    %v449 = vadd.f32 %v407, %v448
    %450 = vdwg.mxu0
    %vm451 = vcmask 64512
    %452 = vst.msk [vmem:[%s9] sm:$0xff] %vm451, %v447
    %453 = vst.msk [vmem:[%s9 + $0x8] sm:$0xff] %vm451, %v449
    // Predicated region
    $region46: #{emotion_model_forward.1} parent=1 // pred_check
      _
    $region47: #{emotion_model_forward.1} parent=1 // pred_check_branch
      %455 = sbr.rel (0) target = $region49
    $region48: #{emotion_model_forward.1} parent=1 // pred_region
      _
    $region49: #{emotion_model_forward.1} parent=1 // pred_fallthru
      _
    // Predicated region
    $region50: #{emotion_model_forward.1} parent=1 // pred_check
      _
    $region51: #{emotion_model_forward.1} parent=1 // pred_check_branch
      %457 = sbr.rel (0) target = $region53
    $region52: #{emotion_model_forward.1} parent=1 // pred_region
      _
    $region53: #{emotion_model_forward.1} parent=1 // pred_fallthru
      _
    %458 = vsyncpa [#allocation3], 1
    %459 = vsyncpa [#allocation5], 1

</llo_original>
